<compile_context>
chip_gen: v7x
topology: tpu7x:2x2x1
jax: 0.10.0
libtpu: 0.0.40
codegen_flags: <defaults>
</compile_context>

<pallas_src>
import functools

import jax
import jax.numpy as jnp
from jax.experimental import pallas as pl
from jax.experimental.pallas import tpu as pltpu


def _round_up(x, m):
    return (x + m - 1) // m * m


def _ode_func_kernel(t_ref, x_ref, w1_ref, b1_ref, w2_ref, b2_ref,
                     w3_ref, b3_ref, o_ref):
    # t_ref : SMEM (1,1) f32
    # x_ref : VMEM (TN, F)        o_ref : VMEM (TN, F)
    # w1: (F+1, HP)  b1: (1, HP)  w2: (HP, HP)  b2: (1, HP)
    # w3: (HP, F)    b3: (1, F)
    f = x_ref.shape[1]                       # static Python int
    x = x_ref[...].astype(jnp.float32)       # (TN, F)
    t = t_ref[0, 0]

    # --- layer 1: concat(x, t) @ W1 + b1, as F broadcast FMAs (F is tiny) ---
    h = x[:, 0:1] * w1_ref[0:1, :]                      # (TN, HP)
    for k in range(1, f):
        h = h + x[:, k:k + 1] * w1_ref[k:k + 1, :]
    h = h + (t * w1_ref[f:f + 1, :] + b1_ref[...])      # (1, HP) broadcast
    h = jnp.tanh(h)

    # --- layer 2: full-width (TN, HP) @ (HP, HP) on the MXU ---
    h = jnp.dot(h, w2_ref[...], preferred_element_type=jnp.float32)
    h = jnp.tanh(h + b2_ref[...])

    # --- layer 3: (TN, HP) @ (HP, F) -> velocity field (TN, F) ---
    out = jnp.dot(h, w3_ref[...], preferred_element_type=jnp.float32)
    out = out + b3_ref[...]
    o_ref[...] = out.astype(o_ref.dtype)


@functools.partial(jax.jit, static_argnames=("block_n",))
def ode_func_wrapper(t, x, padded_params, block_n=1024):
    """t: scalar (or any 1-element array); x: (N, F) f32.  Returns (N, F)."""
    w1, b1, w2, b2, w3, b3 = padded_params
    n, f = x.shape

    # Batch tile: multiple of 8 sublanes, capped so it never exceeds N (padded).
    tn = min(block_n, _round_up(n, 8))
    grid_n = pl.cdiv(n, tn)
    n_pad = grid_n * tn
    if n_pad != n:
        x = jnp.pad(x, ((0, n_pad - n), (0, 0)))

    t_arr = jnp.reshape(t, (1, 1)).astype(jnp.float32)

    smem = pl.BlockSpec(memory_space=pltpu.MemorySpace.SMEM)
    resident = lambda shape: pl.BlockSpec(shape, lambda i: (0, 0))

    out = pl.pallas_call(
        _ode_func_kernel,
        out_shape=jax.ShapeDtypeStruct((n_pad, f), x.dtype),
        grid=(grid_n,),
        in_specs=[
            smem,                                          # t
            pl.BlockSpec((tn, f), lambda i: (i, 0)),        # x tile
            resident(w1.shape), resident(b1.shape),         # weights stay put
            resident(w2.shape), resident(b2.shape),
            resident(w3.shape), resident(b3.shape),
        ],
        out_specs=pl.BlockSpec((tn, f), lambda i: (i, 0)),
        compiler_params=pltpu.CompilerParams(
            dimension_semantics=("parallel",)),
    )(t_arr, x, w1, b1, w2, b2, w3, b3)

    return out[:n]


def init_params(key, n_features, hidden):
    """Deterministic synthetic weights, stored as (in_dim, out_dim)."""
    k1, k2, k3, k4, k5, k6 = jax.random.split(key, 6)
    w1 = jax.random.normal(k1, (n_features + 1, hidden), jnp.float32) * 0.1
    b1 = jax.random.normal(k2, (1, hidden), jnp.float32) * 0.01
    w2 = jax.random.normal(k3, (hidden, hidden), jnp.float32) * 0.1
    b2 = jax.random.normal(k4, (1, hidden), jnp.float32) * 0.01
    w3 = jax.random.normal(k5, (hidden, n_features), jnp.float32) * 0.1
    b3 = jax.random.normal(k6, (1, n_features), jnp.float32) * 0.01
    return (w1, b1, w2, b2, w3, b3)


def pad_params(params, hidden_pad=128):
    """Zero-pad the hidden dim to `hidden_pad` lanes (exactly equivalent math)."""
    w1, b1, w2, b2, w3, b3 = params
    h = w2.shape[0]
    ph = hidden_pad - h
    assert ph >= 0
    w1p = jnp.pad(w1, ((0, 0), (0, ph)))
    b1p = jnp.pad(b1, ((0, 0), (0, ph)))
    w2p = jnp.pad(w2, ((0, ph), (0, ph)))
    b2p = jnp.pad(b2, ((0, 0), (0, ph)))
    w3p = jnp.pad(w3, ((0, ph), (0, 0)))
    return (w1p, b1p, w2p, b2p, w3p, b3)


def ode_func_ref(t, x, params):
    """Pure-JAX reference mirroring the PyTorch forward (explicit concat)."""
    w1, b1, w2, b2, w3, b3 = params
    t_expanded = jnp.broadcast_to(jnp.reshape(t, (1, 1)), (x.shape[0], 1))
    xt = jnp.concatenate([x, t_expanded], axis=-1)
    h = jnp.tanh(xt @ w1 + b1)
    h = jnp.tanh(h @ w2 + b2)
    return h @ w3 + b3


if __name__ == "__main__":
    key = jax.random.PRNGKey(0)
    kx, kt, kp = jax.random.split(key, 3)

    # Small shapes, but N deliberately non-multiple-of-tile to exercise the
    # gridded + padded path (tile=128 rows -> 4 grid steps).
    n_samples, n_features, hidden = 500, 4, 32
    x = jax.random.normal(kx, (n_samples, n_features), jnp.float32)
    t = jax.random.uniform(kt, (1, 1), jnp.float32)           # scalar time

    params = init_params(kp, n_features, hidden)
    padded = pad_params(params, hidden_pad=128)

    out = ode_func_wrapper(t, x, padded, block_n=128)
    out = jax.block_until_ready(out)

    ref = ode_func_ref(t, x, params)
    assert out.shape == (n_samples, n_features)
    assert jnp.allclose(out, ref, atol=1e-5, rtol=1e-5), "mismatch vs reference"

    print("KERNEL_OK")
</pallas_src>

<mosaic_0001>
module attributes {stable_mosaic.version = 11 : i64} {
  func.func @_ode_func_kernel(%arg0: i32, %arg1: memref<1x1xf32, #tpu.memory_space<smem>>, %arg2: memref<128x4xf32, #tpu.memory_space<vmem>>, %arg3: memref<5x128xf32, #tpu.memory_space<vmem>>, %arg4: memref<1x128xf32, #tpu.memory_space<vmem>>, %arg5: memref<128x128xf32, #tpu.memory_space<vmem>>, %arg6: memref<1x128xf32, #tpu.memory_space<vmem>>, %arg7: memref<128x4xf32, #tpu.memory_space<vmem>>, %arg8: memref<1x4xf32, #tpu.memory_space<vmem>>, %arg9: memref<128x4xf32, #tpu.memory_space<vmem>>) attributes {dimension_semantics = [#tpu.dimension_semantics<parallel>], iteration_bounds = array<i64: 4>, scalar_prefetch = 0 : i64, scratch_operands = 0 : i64, tpu.core_type = #tpu.core_type<tc>, window_params = [{transform_indices = @transform_0, window_bounds = array<i64: 1, 1>}, {transform_indices = @transform_1, window_bounds = array<i64: 128, 4>}, {pipeline_mode = #tpu.pipeline_mode<synchronous>, transform_indices = @transform_2, window_bounds = array<i64: 5, 128>}, {pipeline_mode = #tpu.pipeline_mode<synchronous>, transform_indices = @transform_3, window_bounds = array<i64: 1, 128>}, {pipeline_mode = #tpu.pipeline_mode<synchronous>, transform_indices = @transform_4, window_bounds = array<i64: 128, 128>}, {pipeline_mode = #tpu.pipeline_mode<synchronous>, transform_indices = @transform_5, window_bounds = array<i64: 1, 128>}, {pipeline_mode = #tpu.pipeline_mode<synchronous>, transform_indices = @transform_6, window_bounds = array<i64: 128, 4>}, {pipeline_mode = #tpu.pipeline_mode<synchronous>, transform_indices = @transform_7, window_bounds = array<i64: 1, 4>}, {transform_indices = @transform_8, window_bounds = array<i64: 128, 4>}]} {
    %c0 = arith.constant 0 : index
    %c0_0 = arith.constant 0 : index
    %0 = vector.load %arg2[%c0, %c0_0] : memref<128x4xf32, #tpu.memory_space<vmem>>, vector<128x4xf32>
    %c0_1 = arith.constant 0 : index
    %c0_2 = arith.constant 0 : index
    %1 = memref.load %arg1[%c0_1, %c0_2] : memref<1x1xf32, #tpu.memory_space<smem>>
    %2 = vector.extract_strided_slice %0 {offsets = [0, 0], sizes = [128, 1], strides = [1, 1]} : vector<128x4xf32> to vector<128x1xf32>
    %c0_3 = arith.constant 0 : index
    %c0_4 = arith.constant 0 : index
    %3 = vector.load %arg3[%c0_3, %c0_4] : memref<5x128xf32, #tpu.memory_space<vmem>>, vector<1x128xf32>
    %4 = vector.broadcast %2 : vector<128x1xf32> to vector<128x128xf32>
    %5 = vector.broadcast %3 : vector<1x128xf32> to vector<128x128xf32>
    %6 = arith.mulf %4, %5 : vector<128x128xf32>
    %7 = vector.extract_strided_slice %0 {offsets = [0, 1], sizes = [128, 1], strides = [1, 1]} : vector<128x4xf32> to vector<128x1xf32>
    %c1 = arith.constant 1 : index
    %c0_5 = arith.constant 0 : index
    %8 = vector.load %arg3[%c1, %c0_5] : memref<5x128xf32, #tpu.memory_space<vmem>>, vector<1x128xf32>
    %9 = vector.broadcast %7 : vector<128x1xf32> to vector<128x128xf32>
    %10 = vector.broadcast %8 : vector<1x128xf32> to vector<128x128xf32>
    %11 = arith.mulf %9, %10 : vector<128x128xf32>
    %12 = arith.addf %6, %11 : vector<128x128xf32>
    %13 = vector.extract_strided_slice %0 {offsets = [0, 2], sizes = [128, 1], strides = [1, 1]} : vector<128x4xf32> to vector<128x1xf32>
    %c2 = arith.constant 2 : index
    %c0_6 = arith.constant 0 : index
    %14 = vector.load %arg3[%c2, %c0_6] : memref<5x128xf32, #tpu.memory_space<vmem>>, vector<1x128xf32>
    %15 = vector.broadcast %13 : vector<128x1xf32> to vector<128x128xf32>
    %16 = vector.broadcast %14 : vector<1x128xf32> to vector<128x128xf32>
    %17 = arith.mulf %15, %16 : vector<128x128xf32>
    %18 = arith.addf %12, %17 : vector<128x128xf32>
    %19 = vector.extract_strided_slice %0 {offsets = [0, 3], sizes = [128, 1], strides = [1, 1]} : vector<128x4xf32> to vector<128x1xf32>
    %c3 = arith.constant 3 : index
    %c0_7 = arith.constant 0 : index
    %20 = vector.load %arg3[%c3, %c0_7] : memref<5x128xf32, #tpu.memory_space<vmem>>, vector<1x128xf32>
    %21 = vector.broadcast %19 : vector<128x1xf32> to vector<128x128xf32>
    %22 = vector.broadcast %20 : vector<1x128xf32> to vector<128x128xf32>
    %23 = arith.mulf %21, %22 : vector<128x128xf32>
    %24 = arith.addf %18, %23 : vector<128x128xf32>
    %c4 = arith.constant 4 : index
    %c0_8 = arith.constant 0 : index
    %25 = vector.load %arg3[%c4, %c0_8] : memref<5x128xf32, #tpu.memory_space<vmem>>, vector<1x128xf32>
    %26 = vector.broadcast %1 : f32 to vector<1x128xf32>
    %27 = arith.mulf %26, %25 : vector<1x128xf32>
    %c0_9 = arith.constant 0 : index
    %c0_10 = arith.constant 0 : index
    %28 = vector.load %arg4[%c0_9, %c0_10] : memref<1x128xf32, #tpu.memory_space<vmem>>, vector<1x128xf32>
    %29 = arith.addf %27, %28 : vector<1x128xf32>
    %30 = vector.broadcast %29 : vector<1x128xf32> to vector<128x128xf32>
    %31 = arith.addf %24, %30 : vector<128x128xf32>
    %32 = math.tanh %31 : vector<128x128xf32>
    %c0_11 = arith.constant 0 : index
    %c0_12 = arith.constant 0 : index
    %33 = vector.load %arg5[%c0_11, %c0_12] : memref<128x128xf32, #tpu.memory_space<vmem>>, vector<128x128xf32>
    %cst = arith.constant dense<0.000000e+00> : vector<128x128xf32>
    %34 = tpu.matmul %32, %33, %cst {dimension_numbers = #tpu.dot_dimension_numbers<[1], [0], [0], [1], [0, 0, 1, 1], [], []>} : vector<128x128xf32>, vector<128x128xf32>, vector<128x128xf32> -> vector<128x128xf32>
    %c0_13 = arith.constant 0 : index
    %c0_14 = arith.constant 0 : index
    %35 = vector.load %arg6[%c0_13, %c0_14] : memref<1x128xf32, #tpu.memory_space<vmem>>, vector<1x128xf32>
    %36 = vector.broadcast %35 : vector<1x128xf32> to vector<128x128xf32>
    %37 = arith.addf %34, %36 : vector<128x128xf32>
    %38 = math.tanh %37 : vector<128x128xf32>
    %c0_15 = arith.constant 0 : index
    %c0_16 = arith.constant 0 : index
    %39 = vector.load %arg7[%c0_15, %c0_16] : memref<128x4xf32, #tpu.memory_space<vmem>>, vector<128x4xf32>
    %cst_17 = arith.constant dense<0.000000e+00> : vector<128x4xf32>
    %40 = tpu.matmul %38, %39, %cst_17 {dimension_numbers = #tpu.dot_dimension_numbers<[1], [0], [0], [1], [0, 0, 1, 1], [], []>} : vector<128x128xf32>, vector<128x4xf32>, vector<128x4xf32> -> vector<128x4xf32>
    %c0_18 = arith.constant 0 : index
    %c0_19 = arith.constant 0 : index
    %41 = vector.load %arg8[%c0_18, %c0_19] : memref<1x4xf32, #tpu.memory_space<vmem>>, vector<1x4xf32>
    %42 = vector.broadcast %41 : vector<1x4xf32> to vector<128x4xf32>
    %43 = arith.addf %40, %42 : vector<128x4xf32>
    %c0_20 = arith.constant 0 : index
    %c0_21 = arith.constant 0 : index
    %44 = vector.load %arg9[%c0_20, %c0_21] : memref<128x4xf32, #tpu.memory_space<vmem>>, vector<128x4xf32>
    tpu.vector_store %arg9[%c0_20, %c0_21], %43 {strides = array<i32>} : memref<128x4xf32, #tpu.memory_space<vmem>>, vector<128x4xf32>,
    return
  }
  func.func @transform_0(%arg0: i32) -> (i32, i32) {
    %c0_i32 = arith.constant 0 : i32
    %c0_i32_0 = arith.constant 0 : i32
    %c0_i32_1 = arith.constant 0 : i32
    return %c0_i32, %c0_i32_0 : i32, i32
  }
  func.func @transform_1(%arg0: i32) -> (i32, i32) {
    %c0_i32 = arith.constant 0 : i32
    %c0_i32_0 = arith.constant 0 : i32
    return %arg0, %c0_i32 : i32, i32
  }
  func.func @transform_2(%arg0: i32) -> (i32, i32) {
    %c0_i32 = arith.constant 0 : i32
    %c0_i32_0 = arith.constant 0 : i32
    %c0_i32_1 = arith.constant 0 : i32
    return %c0_i32, %c0_i32_0 : i32, i32
  }
  func.func @transform_3(%arg0: i32) -> (i32, i32) {
    %c0_i32 = arith.constant 0 : i32
    %c0_i32_0 = arith.constant 0 : i32
    %c0_i32_1 = arith.constant 0 : i32
    return %c0_i32, %c0_i32_0 : i32, i32
  }
  func.func @transform_4(%arg0: i32) -> (i32, i32) {
    %c0_i32 = arith.constant 0 : i32
    %c0_i32_0 = arith.constant 0 : i32
    %c0_i32_1 = arith.constant 0 : i32
    return %c0_i32, %c0_i32_0 : i32, i32
  }
  func.func @transform_5(%arg0: i32) -> (i32, i32) {
    %c0_i32 = arith.constant 0 : i32
    %c0_i32_0 = arith.constant 0 : i32
    %c0_i32_1 = arith.constant 0 : i32
    return %c0_i32, %c0_i32_0 : i32, i32
  }
  func.func @transform_6(%arg0: i32) -> (i32, i32) {
    %c0_i32 = arith.constant 0 : i32
    %c0_i32_0 = arith.constant 0 : i32
    %c0_i32_1 = arith.constant 0 : i32
    return %c0_i32, %c0_i32_0 : i32, i32
  }
  func.func @transform_7(%arg0: i32) -> (i32, i32) {
    %c0_i32 = arith.constant 0 : i32
    %c0_i32_0 = arith.constant 0 : i32
    %c0_i32_1 = arith.constant 0 : i32
    return %c0_i32, %c0_i32_0 : i32, i32
  }
  func.func @transform_8(%arg0: i32) -> (i32, i32) {
    %c0_i32 = arith.constant 0 : i32
    %c0_i32_0 = arith.constant 0 : i32
    return %arg0, %c0_i32 : i32, i32
  }
}

</mosaic_0001>

<llo_original>
// kernel: ode_func_wrapper.1
$region0: #{ode_func_wrapper.1}
  #allocation0 [shape = 'u32[]', space=smem, size = 0x4, offset = 0x4, fixed_abs, tag = 'smem constant byte address 0x4 - core index']
  #allocation1 [shape = 'u32[144,128]{1,0:T(1,128)}', space=vmem, size = 0x12000, scoped, tag = 'internal scratch']
  #allocation2 [shape = 'f32[1,1]{1,0:T(1,128)S(6)}', space=smem, size = 0x200, scoped, tag = 'scoped memory for ode_func_wrapper.1']
  %s0 = inlined_call_operand.<no memory space> [shape: f32[1,1], index: 0, kind: input, shape index: {}]
  %s1 = inlined_call_operand.vmem [shape: f32[512,4], index: 1, kind: input, shape index: {}]
  %s2 = inlined_call_operand.vmem [shape: f32[5,128], index: 2, kind: input, shape index: {}]
  %s3 = inlined_call_operand.vmem [shape: f32[1,128], index: 3, kind: input, shape index: {}]
  %s4 = inlined_call_operand.vmem [shape: f32[128,128], index: 4, kind: input, shape index: {}]
  %s5 = inlined_call_operand.vmem [shape: f32[1,128], index: 5, kind: input, shape index: {}]
  %s6 = inlined_call_operand.vmem [shape: f32[128,4], index: 6, kind: input, shape index: {}]
  %s7 = inlined_call_operand.vmem [shape: f32[1,4], index: 7, kind: input, shape index: {}]
  %s8 = inlined_call_operand.vmem [shape: f32[512,4], index: 8, kind: output, shape index: {}]
  %s9 = sld [smem:[#allocation0]]
  $region65: #{ode_func_wrapper.1} parent=0
    _
  %s11 = ssub.s32 1, %s9
  %s12 = scalar_select 0, %s11, %s9
  %13 = sst [smem:[#allocation2]] %s0
  loop: start=0, step=1, limit=6
  $region2: #{ode_func_wrapper.1} parent=0 // loop_pre_header
    _
  $region3: #{ode_func_wrapper.1} parent=0 // loop_header
    %s15 = sphi 0, %s19
    %p16 = scmp.ge.s32.totalorder %s15, 6
    %s23 = sphi 0, %s23
    %s25 = sphi 0, %s23
    %s26 = sphi 0, %s25
    %s40 = sphi 0, %s26
    %s46 = sphi 0, %s48
    %s49 = sphi 0, %s46
    %s50 = sphi 0, %s49
    %s66 = sphi 0, %s50
    %s70 = sphi 0, %s70
    %s72 = sphi 0, %s70
    %s73 = sphi 0, %s72
    %s87 = sphi 0, %s73
    %s91 = sphi 0, %s91
    %s93 = sphi 0, %s91
    %s94 = sphi 0, %s93
    %s108 = sphi 0, %s94
    %s112 = sphi 0, %s112
    %s114 = sphi 0, %s112
    %s115 = sphi 0, %s114
    %s129 = sphi 0, %s115
    %s133 = sphi 0, %s133
    %s135 = sphi 0, %s133
    %s136 = sphi 0, %s135
    %s150 = sphi 0, %s136
    %s154 = sphi 0, %s154
    %s156 = sphi 0, %s154
    %s157 = sphi 0, %s156
    %s171 = sphi 0, %s157
    %s175 = sphi 0, %s175
    %s177 = sphi 0, %s175
    %s178 = sphi 0, %s177
    %s192 = sphi 0, %s178
    %s198 = sphi 0, %s200
    %s201 = sphi 0, %s198
    %s202 = sphi 0, %s201
    %s218 = sphi 0, %s202
  $region4: #{ode_func_wrapper.1} parent=0 // loop_header_branch
    %18 = sbr.rel (%p16) target = $region8
  $region5: #{ode_func_wrapper.1} parent=0 // loop_body
    %s20 = ssub.s32 %s15, 1
    %s21 = ssub.s32 %s15, 2
    %s22 = sadd.s32 %s15, 1
    %s24 = sadd.s32 %s23, 1
    %p27 = scmp.eq.s32.totalorder %s15, 3
    %p28 = scmp.ne.s32.totalorder %s23, %s25
    %p29 = scmp.eq.s32.totalorder %s15, 0
    %p30 = por %p28, %p29
    %p31 = scmp.ne.s32.totalorder %s23, %s25
    %p32 = scmp.eq.s32.totalorder %s20, 3
    %p33 = por %p31, %p32
    %p34 = scmp.ne.s32.totalorder %s25, %s26
    %p35 = scmp.eq.s32.totalorder %s20, 0
    %p36 = por %p34, %p35
    %p37 = scmp.ne.s32.totalorder %s25, %s26
    %p38 = scmp.eq.s32.totalorder %s21, 3
    %p39 = por %p37, %p38
    %p41 = scmp.ne.s32.totalorder %s26, %s40
    %p42 = scmp.eq.s32.totalorder %s21, 0
    %p43 = por %p41, %p42
    %s44 = ssub.s32 %s15, %s22
    %p45 = scmp.eq.s32.totalorder %s44, 0
    %s47 = sadd.s32 %s46, 1
    %s48 = scalar_select %p45, %s46, %s47
    %p51 = pneg %p45
    %p52 = scmp.eq.s32.totalorder %s15, 3
    %p53 = por %p51, %p52
    %p54 = scmp.ne.s32.totalorder %s46, %s49
    %p55 = scmp.eq.s32.totalorder %s15, 0
    %p56 = por %p54, %p55
    %p57 = scmp.ne.s32.totalorder %s46, %s49
    %p58 = scmp.eq.s32.totalorder %s20, 3
    %p59 = por %p57, %p58
    %p60 = scmp.ne.s32.totalorder %s49, %s50
    %p61 = scmp.eq.s32.totalorder %s20, 0
    %p62 = por %p60, %p61
    %p63 = scmp.ne.s32.totalorder %s49, %s50
    %p64 = scmp.eq.s32.totalorder %s21, 3
    %p65 = por %p63, %p64
    %p67 = scmp.ne.s32.totalorder %s50, %s66
    %p68 = scmp.eq.s32.totalorder %s21, 0
    %p69 = por %p67, %p68
    %s71 = sadd.s32 %s70, 1
    %p74 = scmp.eq.s32.totalorder %s15, 3
    %p75 = scmp.ne.s32.totalorder %s70, %s72
    %p76 = scmp.eq.s32.totalorder %s15, 0
    %p77 = por %p75, %p76
    %p78 = scmp.ne.s32.totalorder %s70, %s72
    %p79 = scmp.eq.s32.totalorder %s20, 3
    %p80 = por %p78, %p79
    %p81 = scmp.ne.s32.totalorder %s72, %s73
    %p82 = scmp.eq.s32.totalorder %s20, 0
    %p83 = por %p81, %p82
    %p84 = scmp.ne.s32.totalorder %s72, %s73
    %p85 = scmp.eq.s32.totalorder %s21, 3
    %p86 = por %p84, %p85
    %p88 = scmp.ne.s32.totalorder %s73, %s87
    %p89 = scmp.eq.s32.totalorder %s21, 0
    %p90 = por %p88, %p89
    %s92 = sadd.s32 %s91, 1
    %p95 = scmp.eq.s32.totalorder %s15, 3
    %p96 = scmp.ne.s32.totalorder %s91, %s93
    %p97 = scmp.eq.s32.totalorder %s15, 0
    %p98 = por %p96, %p97
    %p99 = scmp.ne.s32.totalorder %s91, %s93
    %p100 = scmp.eq.s32.totalorder %s20, 3
    %p101 = por %p99, %p100
    %p102 = scmp.ne.s32.totalorder %s93, %s94
    %p103 = scmp.eq.s32.totalorder %s20, 0
    %p104 = por %p102, %p103
    %p105 = scmp.ne.s32.totalorder %s93, %s94
    %p106 = scmp.eq.s32.totalorder %s21, 3
    %p107 = por %p105, %p106
    %p109 = scmp.ne.s32.totalorder %s94, %s108
    %p110 = scmp.eq.s32.totalorder %s21, 0
    %p111 = por %p109, %p110
    %s113 = sadd.s32 %s112, 1
    %p116 = scmp.eq.s32.totalorder %s15, 3
    %p117 = scmp.ne.s32.totalorder %s112, %s114
    %p118 = scmp.eq.s32.totalorder %s15, 0
    %p119 = por %p117, %p118
    %p120 = scmp.ne.s32.totalorder %s112, %s114
    %p121 = scmp.eq.s32.totalorder %s20, 3
    %p122 = por %p120, %p121
    %p123 = scmp.ne.s32.totalorder %s114, %s115
    %p124 = scmp.eq.s32.totalorder %s20, 0
    %p125 = por %p123, %p124
    %p126 = scmp.ne.s32.totalorder %s114, %s115
    %p127 = scmp.eq.s32.totalorder %s21, 3
    %p128 = por %p126, %p127
    %p130 = scmp.ne.s32.totalorder %s115, %s129
    %p131 = scmp.eq.s32.totalorder %s21, 0
    %p132 = por %p130, %p131
    %s134 = sadd.s32 %s133, 1
    %p137 = scmp.eq.s32.totalorder %s15, 3
    %p138 = scmp.ne.s32.totalorder %s133, %s135
    %p139 = scmp.eq.s32.totalorder %s15, 0
    %p140 = por %p138, %p139
    %p141 = scmp.ne.s32.totalorder %s133, %s135
    %p142 = scmp.eq.s32.totalorder %s20, 3
    %p143 = por %p141, %p142
    %p144 = scmp.ne.s32.totalorder %s135, %s136
    %p145 = scmp.eq.s32.totalorder %s20, 0
    %p146 = por %p144, %p145
    %p147 = scmp.ne.s32.totalorder %s135, %s136
    %p148 = scmp.eq.s32.totalorder %s21, 3
    %p149 = por %p147, %p148
    %p151 = scmp.ne.s32.totalorder %s136, %s150
    %p152 = scmp.eq.s32.totalorder %s21, 0
    %p153 = por %p151, %p152
    %s155 = sadd.s32 %s154, 1
    %p158 = scmp.eq.s32.totalorder %s15, 3
    %p159 = scmp.ne.s32.totalorder %s154, %s156
    %p160 = scmp.eq.s32.totalorder %s15, 0
    %p161 = por %p159, %p160
    %p162 = scmp.ne.s32.totalorder %s154, %s156
    %p163 = scmp.eq.s32.totalorder %s20, 3
    %p164 = por %p162, %p163
    %p165 = scmp.ne.s32.totalorder %s156, %s157
    %p166 = scmp.eq.s32.totalorder %s20, 0
    %p167 = por %p165, %p166
    %p168 = scmp.ne.s32.totalorder %s156, %s157
    %p169 = scmp.eq.s32.totalorder %s21, 3
    %p170 = por %p168, %p169
    %p172 = scmp.ne.s32.totalorder %s157, %s171
    %p173 = scmp.eq.s32.totalorder %s21, 0
    %p174 = por %p172, %p173
    %s176 = sadd.s32 %s175, 1
    %p179 = scmp.eq.s32.totalorder %s15, 3
    %p180 = scmp.ne.s32.totalorder %s175, %s177
    %p181 = scmp.eq.s32.totalorder %s15, 0
    %p182 = por %p180, %p181
    %p183 = scmp.ne.s32.totalorder %s175, %s177
    %p184 = scmp.eq.s32.totalorder %s20, 3
    %p185 = por %p183, %p184
    %p186 = scmp.ne.s32.totalorder %s177, %s178
    %p187 = scmp.eq.s32.totalorder %s20, 0
    %p188 = por %p186, %p187
    %p189 = scmp.ne.s32.totalorder %s177, %s178
    %p190 = scmp.eq.s32.totalorder %s21, 3
    %p191 = por %p189, %p190
    %p193 = scmp.ne.s32.totalorder %s178, %s192
    %p194 = scmp.eq.s32.totalorder %s21, 0
    %p195 = por %p193, %p194
    %s196 = ssub.s32 %s15, %s22
    %p197 = scmp.eq.s32.totalorder %s196, 0
    %s199 = sadd.s32 %s198, 1
    %s200 = scalar_select %p197, %s198, %s199
    %p203 = pneg %p197
    %p204 = scmp.eq.s32.totalorder %s15, 3
    %p205 = por %p203, %p204
    %p206 = scmp.ne.s32.totalorder %s198, %s201
    %p207 = scmp.eq.s32.totalorder %s15, 0
    %p208 = por %p206, %p207
    %p209 = scmp.ne.s32.totalorder %s198, %s201
    %p210 = scmp.eq.s32.totalorder %s20, 3
    %p211 = por %p209, %p210
    %p212 = scmp.ne.s32.totalorder %s201, %s202
    %p213 = scmp.eq.s32.totalorder %s20, 0
    %p214 = por %p212, %p213
    %p215 = scmp.ne.s32.totalorder %s201, %s202
    %p216 = scmp.eq.s32.totalorder %s21, 3
    %p217 = por %p215, %p216
    %p219 = scmp.ne.s32.totalorder %s202, %s218
    %p220 = scmp.eq.s32.totalorder %s21, 0
    %p221 = por %p219, %p220
    %p222 = scmp.le.s32.totalorder 1, %s15
    %p223 = scmp.lt.s32.totalorder %s15, 5
    %p224 = pnand %p222, %p223
    %p225 = pneg %p224
    // Predicated region
    $region9: #{ode_func_wrapper.1} parent=5 // pred_check
      _
    $region10: #{ode_func_wrapper.1} parent=5 // pred_check_branch
      %227 = sbr.rel (%p224) target = $region12
    $region11: #{ode_func_wrapper.1} parent=5 // pred_region
      %s228 = ssub.s32 %s15, 1
      // Predicated region
      $region13: #{ode_func_wrapper.1} parent=11 // pred_check
        %p229 = pneg %p36
      $region14: #{ode_func_wrapper.1} parent=11 // pred_check_branch
        %231 = sbr.rel (%p229) target = $region16
      $region15: #{ode_func_wrapper.1} parent=11 // pred_region
        _
      $region16: #{ode_func_wrapper.1} parent=11 // pred_fallthru
        _
      // Predicated region
      $region17: #{ode_func_wrapper.1} parent=11 // pred_check
        %p232 = pneg %p83
      $region18: #{ode_func_wrapper.1} parent=11 // pred_check_branch
        %234 = sbr.rel (%p232) target = $region20
      $region19: #{ode_func_wrapper.1} parent=11 // pred_region
        _
      $region20: #{ode_func_wrapper.1} parent=11 // pred_fallthru
        _
      // Predicated region
      $region21: #{ode_func_wrapper.1} parent=11 // pred_check
        %p235 = pneg %p104
      $region22: #{ode_func_wrapper.1} parent=11 // pred_check_branch
        %237 = sbr.rel (%p235) target = $region24
      $region23: #{ode_func_wrapper.1} parent=11 // pred_region
        _
      $region24: #{ode_func_wrapper.1} parent=11 // pred_fallthru
        _
      // Predicated region
      $region25: #{ode_func_wrapper.1} parent=11 // pred_check
        %p238 = pneg %p125
      $region26: #{ode_func_wrapper.1} parent=11 // pred_check_branch
        %240 = sbr.rel (%p238) target = $region28
      $region27: #{ode_func_wrapper.1} parent=11 // pred_region
        _
      $region28: #{ode_func_wrapper.1} parent=11 // pred_fallthru
        _
      // Predicated region
      $region29: #{ode_func_wrapper.1} parent=11 // pred_check
        %p241 = pneg %p146
      $region30: #{ode_func_wrapper.1} parent=11 // pred_check_branch
        %243 = sbr.rel (%p241) target = $region32
      $region31: #{ode_func_wrapper.1} parent=11 // pred_region
        _
      $region32: #{ode_func_wrapper.1} parent=11 // pred_fallthru
        _
      // Predicated region
      $region33: #{ode_func_wrapper.1} parent=11 // pred_check
        %p244 = pneg %p167
      $region34: #{ode_func_wrapper.1} parent=11 // pred_check_branch
        %246 = sbr.rel (%p244) target = $region36
      $region35: #{ode_func_wrapper.1} parent=11 // pred_region
        _
      $region36: #{ode_func_wrapper.1} parent=11 // pred_fallthru
        _
      // Predicated region
      $region37: #{ode_func_wrapper.1} parent=11 // pred_check
        %p247 = pneg %p188
      $region38: #{ode_func_wrapper.1} parent=11 // pred_check_branch
        %249 = sbr.rel (%p247) target = $region40
      $region39: #{ode_func_wrapper.1} parent=11 // pred_region
        _
      $region40: #{ode_func_wrapper.1} parent=11 // pred_fallthru
        _
    $region12: #{ode_func_wrapper.1} parent=5 // pred_fallthru
      _
    %p250 = scmp.lt.s32.totalorder %s15, 4
    // Predicated region
    $region41: #{ode_func_wrapper.1} parent=5 // pred_check
      %p251 = pneg %p250
    $region42: #{ode_func_wrapper.1} parent=5 // pred_check_branch
      %253 = sbr.rel (%p251) target = $region44
    $region43: #{ode_func_wrapper.1} parent=5 // pred_region
      // Predicated region
      $region45: #{ode_func_wrapper.1} parent=43 // pred_check
        %p254 = pneg %p56
      $region46: #{ode_func_wrapper.1} parent=43 // pred_check_branch
        %256 = sbr.rel (%p254) target = $region48
      $region47: #{ode_func_wrapper.1} parent=43 // pred_region
        %s257 = smul.u32 16, %s15
        %p258 = scmp.lt.s32.totalorder %s257, 63
        %s259 = scalar_select %p258, %s257, 63
        %s260 = smul.addr %s259, 8
        %s261 = scalar_lea.vmem %s1, %s260
        %s262 = smul.u32 16, %s15
      $region48: #{ode_func_wrapper.1} parent=43 // pred_fallthru
        _
    $region44: #{ode_func_wrapper.1} parent=5 // pred_fallthru
      _
    %p263 = scmp.le.s32.totalorder 1, %s15
    %p264 = scmp.lt.s32.totalorder %s15, 5
    %p265 = pnand %p263, %p264
    %p266 = pneg %p265
    // Predicated region
    $region49: #{ode_func_wrapper.1} parent=5 // pred_check
      _
    $region50: #{ode_func_wrapper.1} parent=5 // pred_check_branch
      %268 = sbr.rel (%p265) target = $region52
    $region51: #{ode_func_wrapper.1} parent=5 // pred_region
      %s269 = ssub.s32 %s15, 1
      %p270 = pneg %p36
      %p271 = pneg %p33
      %s272 = smul.u32 16, %s20
      %p273 = scmp.lt.s32.totalorder %s272, 63
      %s274 = scalar_select %p273, %s272, 63
      %s275 = smul.addr %s274, 8
      %s276 = scalar_lea.vmem %s1, %s275
      %p277 = pneg %p62
      %p278 = pneg %p59
      %p279 = pneg %p83
      %p280 = pneg %p80
      %p281 = pneg %p104
      %p282 = pneg %p101
      %p283 = pneg %p125
      %p284 = pneg %p122
      %p285 = pneg %p146
      %p286 = pneg %p143
      %p287 = pneg %p167
      %p288 = pneg %p164
      %p289 = pneg %p188
      %p290 = pneg %p185
      %p291 = pneg %p214
      %p292 = pneg %p211
      %s293 = smul.u32 16, %s20
      %p294 = scmp.lt.s32.totalorder %s293, 63
      %s295 = scalar_select %p294, %s293, 63
      %s296 = smul.addr %s295, 8
      %s297 = scalar_lea.vmem %s8, %s296
      %s298 = smul.u32 16, %s20
      %p299 = scmp.lt.s32.totalorder %s298, 63
      %s300 = scalar_select %p299, %s298, 63
      %s301 = smul.addr %s300, 8
      %s302 = scalar_lea.vmem %s1, %s301
      %s303 = smul.u32 16, %s20
      %s304 = smul.u32 16, %s20
      %p305 = scmp.lt.s32.totalorder %s304, 63
      %s306 = scalar_select %p305, %s304, 63
      %s307 = smul.addr %s306, 8
      %s308 = scalar_lea.vmem %s8, %s307
      %s309 = smul.u32 16, %s20
      %v310 = vld [vmem:[%s302] sm:$0xff]
      %v311 = vld [vmem:[%s302 + $0x8] sm:$0xff]
      %v312 = vld [vmem:[%s302 + $0x10] sm:$0xff]
      %v313 = vld [vmem:[%s302 + $0x18] sm:$0xff]
      %v314 = vld [vmem:[%s302 + $0x20] sm:$0xff]
      %v315 = vld [vmem:[%s302 + $0x28] sm:$0xff]
      %v316 = vld [vmem:[%s302 + $0x30] sm:$0xff]
      %v317 = vld [vmem:[%s302 + $0x38] sm:$0xff]
      %v318 = vld [vmem:[%s302 + $0x40] sm:$0xff]
      %v319 = vld [vmem:[%s302 + $0x48] sm:$0xff]
      %v320 = vld [vmem:[%s302 + $0x50] sm:$0xff]
      %v321 = vld [vmem:[%s302 + $0x58] sm:$0xff]
      %v322 = vld [vmem:[%s302 + $0x60] sm:$0xff]
      %v323 = vld [vmem:[%s302 + $0x68] sm:$0xff]
      %v324 = vld [vmem:[%s302 + $0x70] sm:$0xff]
      %v325 = vld [vmem:[%s302 + $0x78] sm:$0xff]
      %s326 = sld [smem:[#allocation2]]
      %v327 = vld [vmem:[%s2] sm:$0x1]
      %329 = vset.pattern.permute.xlu0 0
      %330 = vperm.xlu0 %329, %v310
      %v331 = vpop.permute.xlu0 %330
      %334 = vset.pattern.permute.xlu0 0
      %335 = vperm.xlu0 %334, %v311
      %v336 = vpop.permute.xlu0 %335
      %339 = vset.pattern.permute.xlu0 0
      %340 = vperm.xlu0 %339, %v312
      %v341 = vpop.permute.xlu0 %340
      %344 = vset.pattern.permute.xlu0 0
      %345 = vperm.xlu0 %344, %v313
      %v346 = vpop.permute.xlu0 %345
      %349 = vset.pattern.permute.xlu0 0
      %350 = vperm.xlu0 %349, %v314
      %v351 = vpop.permute.xlu0 %350
      %354 = vset.pattern.permute.xlu0 0
      %355 = vperm.xlu0 %354, %v315
      %v356 = vpop.permute.xlu0 %355
      %359 = vset.pattern.permute.xlu0 0
      %360 = vperm.xlu0 %359, %v316
      %v361 = vpop.permute.xlu0 %360
      %364 = vset.pattern.permute.xlu0 0
      %365 = vperm.xlu0 %364, %v317
      %v366 = vpop.permute.xlu0 %365
      %369 = vset.pattern.permute.xlu0 0
      %370 = vperm.xlu0 %369, %v318
      %v371 = vpop.permute.xlu0 %370
      %374 = vset.pattern.permute.xlu0 0
      %375 = vperm.xlu0 %374, %v319
      %v376 = vpop.permute.xlu0 %375
      %379 = vset.pattern.permute.xlu0 0
      %380 = vperm.xlu0 %379, %v320
      %v381 = vpop.permute.xlu0 %380
      %384 = vset.pattern.permute.xlu0 0
      %385 = vperm.xlu0 %384, %v321
      %v386 = vpop.permute.xlu0 %385
      %389 = vset.pattern.permute.xlu0 0
      %390 = vperm.xlu0 %389, %v322
      %v391 = vpop.permute.xlu0 %390
      %394 = vset.pattern.permute.xlu0 0
      %395 = vperm.xlu0 %394, %v323
      %v396 = vpop.permute.xlu0 %395
      %399 = vset.pattern.permute.xlu0 0
      %400 = vperm.xlu0 %399, %v324
      %v401 = vpop.permute.xlu0 %400
      %404 = vset.pattern.permute.xlu0 0
      %405 = vperm.xlu0 %404, %v325
      %v406 = vpop.permute.xlu0 %405
      %v408 = vlaneseq
      %v409 = vshrl.u32 %v408, 7
      %v410 = vsub.s32 0, %v409
      %v411 = vrot.slane %v327, %v410
      %v412 = vmul.f32 %v331, %v411
      %v413 = vmul.f32 %v336, %v411
      %v414 = vmul.f32 %v341, %v411
      %v415 = vmul.f32 %v346, %v411
      %v416 = vmul.f32 %v351, %v411
      %v417 = vmul.f32 %v356, %v411
      %v418 = vmul.f32 %v361, %v411
      %v419 = vmul.f32 %v366, %v411
      %v420 = vmul.f32 %v371, %v411
      %v421 = vmul.f32 %v376, %v411
      %v422 = vmul.f32 %v381, %v411
      %v423 = vmul.f32 %v386, %v411
      %v424 = vmul.f32 %v391, %v411
      %v425 = vmul.f32 %v396, %v411
      %v426 = vmul.f32 %v401, %v411
      %v427 = vmul.f32 %v406, %v411
      %v428 = vld [vmem:[%s2 + $0x1] sm:$0x1]
      %429 = vset.pattern.permute.xlu0 1
      %430 = vperm.xlu0 %429, %v310
      %v431 = vpop.permute.xlu0 %430
      %433 = vset.pattern.permute.xlu0 1
      %434 = vperm.xlu0 %433, %v311
      %v435 = vpop.permute.xlu0 %434
      %437 = vset.pattern.permute.xlu0 1
      %438 = vperm.xlu0 %437, %v312
      %v439 = vpop.permute.xlu0 %438
      %441 = vset.pattern.permute.xlu0 1
      %442 = vperm.xlu0 %441, %v313
      %v443 = vpop.permute.xlu0 %442
      %445 = vset.pattern.permute.xlu0 1
      %446 = vperm.xlu0 %445, %v314
      %v447 = vpop.permute.xlu0 %446
      %449 = vset.pattern.permute.xlu0 1
      %450 = vperm.xlu0 %449, %v315
      %v451 = vpop.permute.xlu0 %450
      %453 = vset.pattern.permute.xlu0 1
      %454 = vperm.xlu0 %453, %v316
      %v455 = vpop.permute.xlu0 %454
      %457 = vset.pattern.permute.xlu0 1
      %458 = vperm.xlu0 %457, %v317
      %v459 = vpop.permute.xlu0 %458
      %461 = vset.pattern.permute.xlu0 1
      %462 = vperm.xlu0 %461, %v318
      %v463 = vpop.permute.xlu0 %462
      %465 = vset.pattern.permute.xlu0 1
      %466 = vperm.xlu0 %465, %v319
      %v467 = vpop.permute.xlu0 %466
      %469 = vset.pattern.permute.xlu0 1
      %470 = vperm.xlu0 %469, %v320
      %v471 = vpop.permute.xlu0 %470
      %473 = vset.pattern.permute.xlu0 1
      %474 = vperm.xlu0 %473, %v321
      %v475 = vpop.permute.xlu0 %474
      %477 = vset.pattern.permute.xlu0 1
      %478 = vperm.xlu0 %477, %v322
      %v479 = vpop.permute.xlu0 %478
      %481 = vset.pattern.permute.xlu0 1
      %482 = vperm.xlu0 %481, %v323
      %v483 = vpop.permute.xlu0 %482
      %485 = vset.pattern.permute.xlu0 1
      %486 = vperm.xlu0 %485, %v324
      %v487 = vpop.permute.xlu0 %486
      %489 = vset.pattern.permute.xlu0 1
      %490 = vperm.xlu0 %489, %v325
      %v491 = vpop.permute.xlu0 %490
      %v493 = vlaneseq
      %v494 = vshrl.u32 %v493, 7
      %v495 = vsub.s32 0, %v494
      %v496 = vrot.slane %v428, %v495
      %v497 = vmul.f32 %v431, %v496
      %v498 = vmul.f32 %v435, %v496
      %v499 = vmul.f32 %v439, %v496
      %v500 = vmul.f32 %v443, %v496
      %v501 = vmul.f32 %v447, %v496
      %v502 = vmul.f32 %v451, %v496
      %v503 = vmul.f32 %v455, %v496
      %v504 = vmul.f32 %v459, %v496
      %v505 = vmul.f32 %v463, %v496
      %v506 = vmul.f32 %v467, %v496
      %v507 = vmul.f32 %v471, %v496
      %v508 = vmul.f32 %v475, %v496
      %v509 = vmul.f32 %v479, %v496
      %v510 = vmul.f32 %v483, %v496
      %v511 = vmul.f32 %v487, %v496
      %v512 = vmul.f32 %v491, %v496
      %v513 = vadd.f32 %v412, %v497
      %v514 = vadd.f32 %v413, %v498
      %v515 = vadd.f32 %v414, %v499
      %v516 = vadd.f32 %v415, %v500
      %v517 = vadd.f32 %v416, %v501
      %v518 = vadd.f32 %v417, %v502
      %v519 = vadd.f32 %v418, %v503
      %v520 = vadd.f32 %v419, %v504
      %v521 = vadd.f32 %v420, %v505
      %v522 = vadd.f32 %v421, %v506
      %v523 = vadd.f32 %v422, %v507
      %v524 = vadd.f32 %v423, %v508
      %v525 = vadd.f32 %v424, %v509
      %v526 = vadd.f32 %v425, %v510
      %v527 = vadd.f32 %v426, %v511
      %v528 = vadd.f32 %v427, %v512
      %v529 = vld [vmem:[%s2 + $0x2] sm:$0x1]
      %530 = vset.pattern.permute.xlu0 2
      %531 = vperm.xlu0 %530, %v310
      %v532 = vpop.permute.xlu0 %531
      %534 = vset.pattern.permute.xlu0 2
      %535 = vperm.xlu0 %534, %v311
      %v536 = vpop.permute.xlu0 %535
      %538 = vset.pattern.permute.xlu0 2
      %539 = vperm.xlu0 %538, %v312
      %v540 = vpop.permute.xlu0 %539
      %542 = vset.pattern.permute.xlu0 2
      %543 = vperm.xlu0 %542, %v313
      %v544 = vpop.permute.xlu0 %543
      %546 = vset.pattern.permute.xlu0 2
      %547 = vperm.xlu0 %546, %v314
      %v548 = vpop.permute.xlu0 %547
      %550 = vset.pattern.permute.xlu0 2
      %551 = vperm.xlu0 %550, %v315
      %v552 = vpop.permute.xlu0 %551
      %554 = vset.pattern.permute.xlu0 2
      %555 = vperm.xlu0 %554, %v316
      %v556 = vpop.permute.xlu0 %555
      %558 = vset.pattern.permute.xlu0 2
      %559 = vperm.xlu0 %558, %v317
      %v560 = vpop.permute.xlu0 %559
      %562 = vset.pattern.permute.xlu0 2
      %563 = vperm.xlu0 %562, %v318
      %v564 = vpop.permute.xlu0 %563
      %566 = vset.pattern.permute.xlu0 2
      %567 = vperm.xlu0 %566, %v319
      %v568 = vpop.permute.xlu0 %567
      %570 = vset.pattern.permute.xlu0 2
      %571 = vperm.xlu0 %570, %v320
      %v572 = vpop.permute.xlu0 %571
      %574 = vset.pattern.permute.xlu0 2
      %575 = vperm.xlu0 %574, %v321
      %v576 = vpop.permute.xlu0 %575
      %578 = vset.pattern.permute.xlu0 2
      %579 = vperm.xlu0 %578, %v322
      %v580 = vpop.permute.xlu0 %579
      %582 = vset.pattern.permute.xlu0 2
      %583 = vperm.xlu0 %582, %v323
      %v584 = vpop.permute.xlu0 %583
      %586 = vset.pattern.permute.xlu0 2
      %587 = vperm.xlu0 %586, %v324
      %v588 = vpop.permute.xlu0 %587
      %590 = vset.pattern.permute.xlu0 2
      %591 = vperm.xlu0 %590, %v325
      %v592 = vpop.permute.xlu0 %591
      %v594 = vlaneseq
      %v595 = vshrl.u32 %v594, 7
      %v596 = vsub.s32 0, %v595
      %v597 = vrot.slane %v529, %v596
      %v598 = vmul.f32 %v532, %v597
      %v599 = vmul.f32 %v536, %v597
      %v600 = vmul.f32 %v540, %v597
      %v601 = vmul.f32 %v544, %v597
      %v602 = vmul.f32 %v548, %v597
      %v603 = vmul.f32 %v552, %v597
      %v604 = vmul.f32 %v556, %v597
      %v605 = vmul.f32 %v560, %v597
      %v606 = vmul.f32 %v564, %v597
      %v607 = vmul.f32 %v568, %v597
      %v608 = vmul.f32 %v572, %v597
      %v609 = vmul.f32 %v576, %v597
      %v610 = vmul.f32 %v580, %v597
      %v611 = vmul.f32 %v584, %v597
      %v612 = vmul.f32 %v588, %v597
      %v613 = vmul.f32 %v592, %v597
      %v614 = vadd.f32 %v513, %v598
      %v615 = vadd.f32 %v514, %v599
      %v616 = vadd.f32 %v515, %v600
      %v617 = vadd.f32 %v516, %v601
      %v618 = vadd.f32 %v517, %v602
      %v619 = vadd.f32 %v518, %v603
      %v620 = vadd.f32 %v519, %v604
      %v621 = vadd.f32 %v520, %v605
      %v622 = vadd.f32 %v521, %v606
      %v623 = vadd.f32 %v522, %v607
      %v624 = vadd.f32 %v523, %v608
      %v625 = vadd.f32 %v524, %v609
      %v626 = vadd.f32 %v525, %v610
      %v627 = vadd.f32 %v526, %v611
      %v628 = vadd.f32 %v527, %v612
      %v629 = vadd.f32 %v528, %v613
      %v630 = vld [vmem:[%s2 + $0x3] sm:$0x1]
      %631 = vset.pattern.permute.xlu0 3
      %632 = vperm.xlu0 %631, %v310
      %v633 = vpop.permute.xlu0 %632
      %635 = vset.pattern.permute.xlu0 3
      %636 = vperm.xlu0 %635, %v311
      %v637 = vpop.permute.xlu0 %636
      %639 = vset.pattern.permute.xlu0 3
      %640 = vperm.xlu0 %639, %v312
      %v641 = vpop.permute.xlu0 %640
      %643 = vset.pattern.permute.xlu0 3
      %644 = vperm.xlu0 %643, %v313
      %v645 = vpop.permute.xlu0 %644
      %647 = vset.pattern.permute.xlu0 3
      %648 = vperm.xlu0 %647, %v314
      %v649 = vpop.permute.xlu0 %648
      %651 = vset.pattern.permute.xlu0 3
      %652 = vperm.xlu0 %651, %v315
      %v653 = vpop.permute.xlu0 %652
      %655 = vset.pattern.permute.xlu0 3
      %656 = vperm.xlu0 %655, %v316
      %v657 = vpop.permute.xlu0 %656
      %659 = vset.pattern.permute.xlu0 3
      %660 = vperm.xlu0 %659, %v317
      %v661 = vpop.permute.xlu0 %660
      %663 = vset.pattern.permute.xlu0 3
      %664 = vperm.xlu0 %663, %v318
      %v665 = vpop.permute.xlu0 %664
      %667 = vset.pattern.permute.xlu0 3
      %668 = vperm.xlu0 %667, %v319
      %v669 = vpop.permute.xlu0 %668
      %671 = vset.pattern.permute.xlu0 3
      %672 = vperm.xlu0 %671, %v320
      %v673 = vpop.permute.xlu0 %672
      %675 = vset.pattern.permute.xlu0 3
      %676 = vperm.xlu0 %675, %v321
      %v677 = vpop.permute.xlu0 %676
      %679 = vset.pattern.permute.xlu0 3
      %680 = vperm.xlu0 %679, %v322
      %v681 = vpop.permute.xlu0 %680
      %683 = vset.pattern.permute.xlu0 3
      %684 = vperm.xlu0 %683, %v323
      %v685 = vpop.permute.xlu0 %684
      %687 = vset.pattern.permute.xlu0 3
      %688 = vperm.xlu0 %687, %v324
      %v689 = vpop.permute.xlu0 %688
      %691 = vset.pattern.permute.xlu0 3
      %692 = vperm.xlu0 %691, %v325
      %v693 = vpop.permute.xlu0 %692
      %v695 = vlaneseq
      %v696 = vshrl.u32 %v695, 7
      %v697 = vsub.s32 0, %v696
      %v698 = vrot.slane %v630, %v697
      %v699 = vmul.f32 %v633, %v698
      %v700 = vmul.f32 %v637, %v698
      %v701 = vmul.f32 %v641, %v698
      %v702 = vmul.f32 %v645, %v698
      %v703 = vmul.f32 %v649, %v698
      %v704 = vmul.f32 %v653, %v698
      %v705 = vmul.f32 %v657, %v698
      %v706 = vmul.f32 %v661, %v698
      %v707 = vmul.f32 %v665, %v698
      %v708 = vmul.f32 %v669, %v698
      %v709 = vmul.f32 %v673, %v698
      %v710 = vmul.f32 %v677, %v698
      %v711 = vmul.f32 %v681, %v698
      %v712 = vmul.f32 %v685, %v698
      %v713 = vmul.f32 %v689, %v698
      %v714 = vmul.f32 %v693, %v698
      %v715 = vadd.f32 %v614, %v699
      %v716 = vadd.f32 %v615, %v700
      %v717 = vadd.f32 %v616, %v701
      %v718 = vadd.f32 %v617, %v702
      %v719 = vadd.f32 %v618, %v703
      %v720 = vadd.f32 %v619, %v704
      %v721 = vadd.f32 %v620, %v705
      %v722 = vadd.f32 %v621, %v706
      %v723 = vadd.f32 %v622, %v707
      %v724 = vadd.f32 %v623, %v708
      %v725 = vadd.f32 %v624, %v709
      %v726 = vadd.f32 %v625, %v710
      %v727 = vadd.f32 %v626, %v711
      %v728 = vadd.f32 %v627, %v712
      %v729 = vadd.f32 %v628, %v713
      %v730 = vadd.f32 %v629, %v714
      %v731 = vld [vmem:[%s2 + $0x4] sm:$0x1]
      %v732 = vstv %s326
      %v733 = vmul.f32 %v732, %v731
      %v734 = vld [vmem:[%s3] sm:$0x1]
      %v735 = vadd.f32 %v733, %v734
      %v736 = vlaneseq
      %v737 = vshrl.u32 %v736, 7
      %v738 = vsub.s32 0, %v737
      %v739 = vrot.slane %v735, %v738
      %v740 = vadd.f32 %v715, %v739
      %v741 = vadd.f32 %v716, %v739
      %v742 = vadd.f32 %v717, %v739
      %v743 = vadd.f32 %v718, %v739
      %v744 = vadd.f32 %v719, %v739
      %v745 = vadd.f32 %v720, %v739
      %v746 = vadd.f32 %v721, %v739
      %v747 = vadd.f32 %v722, %v739
      %v748 = vadd.f32 %v723, %v739
      %v749 = vadd.f32 %v724, %v739
      %v750 = vadd.f32 %v725, %v739
      %v751 = vadd.f32 %v726, %v739
      %v752 = vadd.f32 %v727, %v739
      %v753 = vadd.f32 %v728, %v739
      %v754 = vadd.f32 %v729, %v739
      %v755 = vadd.f32 %v730, %v739
      %v756 = vtanh.pop %v740
      %v757 = vtanh.pop %v741
      %v758 = vtanh.pop %v742
      %v759 = vtanh.pop %v743
      %v760 = vtanh.pop %v744
      %v761 = vtanh.pop %v745
      %v762 = vtanh.pop %v746
      %v763 = vtanh.pop %v747
      %v764 = vtanh.pop %v748
      %v765 = vtanh.pop %v749
      %v766 = vtanh.pop %v750
      %v767 = vtanh.pop %v751
      %v768 = vtanh.pop %v752
      %v769 = vtanh.pop %v753
      %v770 = vtanh.pop %v754
      %v771 = vtanh.pop %v755
      %v772 = vld [vmem:[%s4] sm:$0xff]
      %v773 = vld [vmem:[%s4 + $0x8] sm:$0xff]
      %v774 = vld [vmem:[%s4 + $0x10] sm:$0xff]
      %v775 = vld [vmem:[%s4 + $0x18] sm:$0xff]
      %v776 = vld [vmem:[%s4 + $0x20] sm:$0xff]
      %v777 = vld [vmem:[%s4 + $0x28] sm:$0xff]
      %v778 = vld [vmem:[%s4 + $0x30] sm:$0xff]
      %v779 = vld [vmem:[%s4 + $0x38] sm:$0xff]
      %v780 = vld [vmem:[%s4 + $0x40] sm:$0xff]
      %v781 = vld [vmem:[%s4 + $0x48] sm:$0xff]
      %v782 = vld [vmem:[%s4 + $0x50] sm:$0xff]
      %v783 = vld [vmem:[%s4 + $0x58] sm:$0xff]
      %v784 = vld [vmem:[%s4 + $0x60] sm:$0xff]
      %v785 = vld [vmem:[%s4 + $0x68] sm:$0xff]
      %v786 = vld [vmem:[%s4 + $0x70] sm:$0xff]
      %v787 = vld [vmem:[%s4 + $0x78] sm:$0xff]
      %v788 = vld [vmem:[%s5] sm:$0x1]
      %v790 = vlaneseq
      %v791 = vshrl.u32 %v790, 7
      %v792 = vsub.s32 0, %v791
      %v793 = vrot.slane %v788, %v792
      %795 = vmatprep.subr.mxu0 0.0
      %796 = vmatpush1.msra.mxu0 %v772
      %797 = vmatprep.subr.mxu0 0.0
      %798 = vmatpush1.msra.mxu0 %v773
      %799 = vmatprep.subr.mxu0 0.0
      %800 = vmatpush1.msra.mxu0 %v774
      %801 = vmatprep.subr.mxu0 0.0
      %802 = vmatpush1.msra.mxu0 %v775
      %803 = vmatprep.subr.mxu0 0.0
      %804 = vmatpush1.msra.mxu0 %v776
      %805 = vmatprep.subr.mxu0 0.0
      %806 = vmatpush1.msra.mxu0 %v777
      %807 = vmatprep.subr.mxu0 0.0
      %808 = vmatpush1.msra.mxu0 %v778
      %809 = vmatprep.subr.mxu0 0.0
      %810 = vmatpush1.msra.mxu0 %v779
      %811 = vmatprep.subr.mxu0 0.0
      %812 = vmatpush1.msra.mxu0 %v780
      %813 = vmatprep.subr.mxu0 0.0
      %814 = vmatpush1.msra.mxu0 %v781
      %815 = vmatprep.subr.mxu0 0.0
      %816 = vmatpush1.msra.mxu0 %v782
      %817 = vmatprep.subr.mxu0 0.0
      %818 = vmatpush1.msra.mxu0 %v783
      %819 = vmatprep.subr.mxu0 0.0
      %820 = vmatpush1.msra.mxu0 %v784
      %821 = vmatprep.subr.mxu0 0.0
      %822 = vmatpush1.msra.mxu0 %v785
      %823 = vmatprep.subr.mxu0 0.0
      %824 = vmatpush1.msra.mxu0 %v786
      %825 = vmatprep.subr.mxu0 0.0
      %826 = vmatpush1.msra.mxu0 %v787
      %827 = vmatprep.subr.mxu0 0.0
      %828 = vmatpush1.msra.mxu0 0.0
      %829 = vmatprep.subr.mxu0 0.0
      %830 = vmatpush1.msra.mxu0 0.0
      %831 = vmatprep.subr.mxu0 0.0
      %832 = vmatpush1.msra.mxu0 0.0
      %833 = vmatprep.subr.mxu0 0.0
      %834 = vmatpush1.msra.mxu0 0.0
      %835 = vmatprep.subr.mxu0 0.0
      %836 = vmatpush1.msra.mxu0 0.0
      %837 = vmatprep.subr.mxu0 0.0
      %838 = vmatpush1.msra.mxu0 0.0
      %839 = vmatprep.subr.mxu0 0.0
      %840 = vmatpush1.msra.mxu0 0.0
      %841 = vmatprep.subr.mxu0 0.0
      %842 = vmatpush1.msra.mxu0 0.0
      %843 = vmatprep.subr.mxu0 0.0
      %844 = vmatpush1.msra.mxu0 0.0
      %845 = vmatprep.subr.mxu0 0.0
      %846 = vmatpush1.msra.mxu0 0.0
      %847 = vmatprep.subr.mxu0 0.0
      %848 = vmatpush1.msra.mxu0 0.0
      %849 = vmatprep.subr.mxu0 0.0
      %850 = vmatpush1.msra.mxu0 0.0
      %851 = vmatprep.subr.mxu0 0.0
      %852 = vmatpush1.msra.mxu0 0.0
      %853 = vmatprep.subr.mxu0 0.0
      %854 = vmatpush1.msra.mxu0 0.0
      %855 = vmatprep.subr.mxu0 0.0
      %856 = vmatpush1.msra.mxu0 0.0
      %857 = vmatprep.subr.mxu0 0.0
      %858 = vmatpush1.msra.mxu0 0.0
      %859 = vmatprep.mubr.f32.mxu0 0.0
      %860 = vmatmul.mubr.f32.gmra.mrb[0].mxu0 %v756
      %v861 = vpop.f32.mrb[0].mxu0
      %v862 = vadd.f32 %v793, %v861
      %v863 = vpop.f32.mrb[0].mxu0
      %864 = vmatprep.mubr.f32.mxu0 0.0
      %865 = vmatmul.mubr.f32.gmra.mrb[0].mxu0 %v757
      %v866 = vpop.f32.mrb[0].mxu0
      %v867 = vadd.f32 %v793, %v866
      %v868 = vpop.f32.mrb[0].mxu0
      %869 = vmatprep.mubr.f32.mxu0 0.0
      %870 = vmatmul.mubr.f32.gmra.mrb[0].mxu0 %v758
      %v871 = vpop.f32.mrb[0].mxu0
      %v872 = vadd.f32 %v793, %v871
      %v873 = vpop.f32.mrb[0].mxu0
      %874 = vmatprep.mubr.f32.mxu0 0.0
      %875 = vmatmul.mubr.f32.gmra.mrb[0].mxu0 %v759
      %v876 = vpop.f32.mrb[0].mxu0
      %v877 = vadd.f32 %v793, %v876
      %v878 = vpop.f32.mrb[0].mxu0
      %879 = vmatprep.mubr.f32.mxu0 0.0
      %880 = vmatmul.mubr.f32.gmra.mrb[0].mxu0 %v760
      %v881 = vpop.f32.mrb[0].mxu0
      %v882 = vadd.f32 %v793, %v881
      %v883 = vpop.f32.mrb[0].mxu0
      %884 = vmatprep.mubr.f32.mxu0 0.0
      %885 = vmatmul.mubr.f32.gmra.mrb[0].mxu0 %v761
      %v886 = vpop.f32.mrb[0].mxu0
      %v887 = vadd.f32 %v793, %v886
      %v888 = vpop.f32.mrb[0].mxu0
      %889 = vmatprep.mubr.f32.mxu0 0.0
      %890 = vmatmul.mubr.f32.gmra.mrb[0].mxu0 %v762
      %v891 = vpop.f32.mrb[0].mxu0
      %v892 = vadd.f32 %v793, %v891
      %v893 = vpop.f32.mrb[0].mxu0
      %894 = vmatprep.mubr.f32.mxu0 0.0
      %895 = vmatmul.mubr.f32.gmra.mrb[0].mxu0 %v763
      %v896 = vpop.f32.mrb[0].mxu0
      %v897 = vadd.f32 %v793, %v896
      %v898 = vpop.f32.mrb[0].mxu0
      %899 = vmatprep.mubr.f32.mxu0 0.0
      %900 = vmatmul.mubr.f32.gmra.mrb[0].mxu0 %v764
      %v901 = vpop.f32.mrb[0].mxu0
      %v902 = vadd.f32 %v793, %v901
      %v903 = vpop.f32.mrb[0].mxu0
      %904 = vmatprep.mubr.f32.mxu0 0.0
      %905 = vmatmul.mubr.f32.gmra.mrb[0].mxu0 %v765
      %v906 = vpop.f32.mrb[0].mxu0
      %v907 = vadd.f32 %v793, %v906
      %v908 = vpop.f32.mrb[0].mxu0
      %909 = vmatprep.mubr.f32.mxu0 0.0
      %910 = vmatmul.mubr.f32.gmra.mrb[0].mxu0 %v766
      %v911 = vpop.f32.mrb[0].mxu0
      %v912 = vadd.f32 %v793, %v911
      %v913 = vpop.f32.mrb[0].mxu0
      %914 = vmatprep.mubr.f32.mxu0 0.0
      %915 = vmatmul.mubr.f32.gmra.mrb[0].mxu0 %v767
      %v916 = vpop.f32.mrb[0].mxu0
      %v917 = vadd.f32 %v793, %v916
      %v918 = vpop.f32.mrb[0].mxu0
      %919 = vmatprep.mubr.f32.mxu0 0.0
      %920 = vmatmul.mubr.f32.gmra.mrb[0].mxu0 %v768
      %v921 = vpop.f32.mrb[0].mxu0
      %v922 = vadd.f32 %v793, %v921
      %v923 = vpop.f32.mrb[0].mxu0
      %924 = vmatprep.mubr.f32.mxu0 0.0
      %925 = vmatmul.mubr.f32.gmra.mrb[0].mxu0 %v769
      %v926 = vpop.f32.mrb[0].mxu0
      %v927 = vadd.f32 %v793, %v926
      %v928 = vpop.f32.mrb[0].mxu0
      %929 = vmatprep.mubr.f32.mxu0 0.0
      %930 = vmatmul.mubr.f32.gmra.mrb[0].mxu0 %v770
      %v931 = vpop.f32.mrb[0].mxu0
      %v932 = vadd.f32 %v793, %v931
      %v933 = vpop.f32.mrb[0].mxu0
      %934 = vmatprep.mubr.f32.mxu0 0.0
      %935 = vmatmul.mubr.f32.gmra.mrb[0].mxu0 %v771
      %v936 = vpop.f32.mrb[0].mxu0
      %v937 = vadd.f32 %v793, %v936
      %v938 = vpop.f32.mrb[0].mxu0
      %939 = vdwg.mxu0
      %v940 = vtanh.pop %v862
      %v941 = vtanh.pop %v867
      %v942 = vtanh.pop %v872
      %v943 = vtanh.pop %v877
      %v944 = vtanh.pop %v882
      %v945 = vtanh.pop %v887
      %v946 = vtanh.pop %v892
      %v947 = vtanh.pop %v897
      %v948 = vtanh.pop %v902
      %v949 = vtanh.pop %v907
      %v950 = vtanh.pop %v912
      %v951 = vtanh.pop %v917
      %v952 = vtanh.pop %v922
      %v953 = vtanh.pop %v927
      %v954 = vtanh.pop %v932
      %v955 = vtanh.pop %v937
      %v956 = vld [vmem:[%s6] sm:$0xff]
      %v957 = vld [vmem:[%s6 + $0x8] sm:$0xff]
      %v958 = vld [vmem:[%s6 + $0x10] sm:$0xff]
      %v959 = vld [vmem:[%s6 + $0x18] sm:$0xff]
      %v960 = vld [vmem:[%s6 + $0x20] sm:$0xff]
      %v961 = vld [vmem:[%s6 + $0x28] sm:$0xff]
      %v962 = vld [vmem:[%s6 + $0x30] sm:$0xff]
      %v963 = vld [vmem:[%s6 + $0x38] sm:$0xff]
      %v964 = vld [vmem:[%s6 + $0x40] sm:$0xff]
      %v965 = vld [vmem:[%s6 + $0x48] sm:$0xff]
      %v966 = vld [vmem:[%s6 + $0x50] sm:$0xff]
      %v967 = vld [vmem:[%s6 + $0x58] sm:$0xff]
      %v968 = vld [vmem:[%s6 + $0x60] sm:$0xff]
      %v969 = vld [vmem:[%s6 + $0x68] sm:$0xff]
      %v970 = vld [vmem:[%s6 + $0x70] sm:$0xff]
      %v971 = vld [vmem:[%s6 + $0x78] sm:$0xff]
      %v972 = vld [vmem:[%s7] sm:$0x1]
      %v974 = vlaneseq
      %v975 = vshrl.u32 %v974, 7
      %v976 = vsub.s32 0, %v975
      %v977 = vrot.slane %v972, %v976
      %979 = vmatprep.subr.mxu0 0.0
      %980 = vmatpush1.msra.mxu0 %v956
      %981 = vmatprep.subr.mxu0 0.0
      %982 = vmatpush1.msra.mxu0 %v957
      %983 = vmatprep.subr.mxu0 0.0
      %984 = vmatpush1.msra.mxu0 %v958
      %985 = vmatprep.subr.mxu0 0.0
      %986 = vmatpush1.msra.mxu0 %v959
      %987 = vmatprep.subr.mxu0 0.0
      %988 = vmatpush1.msra.mxu0 %v960
      %989 = vmatprep.subr.mxu0 0.0
      %990 = vmatpush1.msra.mxu0 %v961
      %991 = vmatprep.subr.mxu0 0.0
      %992 = vmatpush1.msra.mxu0 %v962
      %993 = vmatprep.subr.mxu0 0.0
      %994 = vmatpush1.msra.mxu0 %v963
      %995 = vmatprep.subr.mxu0 0.0
      %996 = vmatpush1.msra.mxu0 %v964
      %997 = vmatprep.subr.mxu0 0.0
      %998 = vmatpush1.msra.mxu0 %v965
      %999 = vmatprep.subr.mxu0 0.0
      %1000 = vmatpush1.msra.mxu0 %v966
      %1001 = vmatprep.subr.mxu0 0.0
      %1002 = vmatpush1.msra.mxu0 %v967
      %1003 = vmatprep.subr.mxu0 0.0
      %1004 = vmatpush1.msra.mxu0 %v968
      %1005 = vmatprep.subr.mxu0 0.0
      %1006 = vmatpush1.msra.mxu0 %v969
      %1007 = vmatprep.subr.mxu0 0.0
      %1008 = vmatpush1.msra.mxu0 %v970
      %1009 = vmatprep.subr.mxu0 0.0
      %1010 = vmatpush1.msra.mxu0 %v971
      %1011 = vmatprep.subr.mxu0 0.0
      %1012 = vmatpush1.msra.mxu0 0.0
      %1013 = vmatprep.subr.mxu0 0.0
      %1014 = vmatpush1.msra.mxu0 0.0
      %1015 = vmatprep.subr.mxu0 0.0
      %1016 = vmatpush1.msra.mxu0 0.0
      %1017 = vmatprep.subr.mxu0 0.0
      %1018 = vmatpush1.msra.mxu0 0.0
      %1019 = vmatprep.subr.mxu0 0.0
      %1020 = vmatpush1.msra.mxu0 0.0
      %1021 = vmatprep.subr.mxu0 0.0
      %1022 = vmatpush1.msra.mxu0 0.0
      %1023 = vmatprep.subr.mxu0 0.0
      %1024 = vmatpush1.msra.mxu0 0.0
      %1025 = vmatprep.subr.mxu0 0.0
      %1026 = vmatpush1.msra.mxu0 0.0
      %1027 = vmatprep.subr.mxu0 0.0
      %1028 = vmatpush1.msra.mxu0 0.0
      %1029 = vmatprep.subr.mxu0 0.0
      %1030 = vmatpush1.msra.mxu0 0.0
      %1031 = vmatprep.subr.mxu0 0.0
      %1032 = vmatpush1.msra.mxu0 0.0
      %1033 = vmatprep.subr.mxu0 0.0
      %1034 = vmatpush1.msra.mxu0 0.0
      %1035 = vmatprep.subr.mxu0 0.0
      %1036 = vmatpush1.msra.mxu0 0.0
      %1037 = vmatprep.subr.mxu0 0.0
      %1038 = vmatpush1.msra.mxu0 0.0
      %1039 = vmatprep.subr.mxu0 0.0
      %1040 = vmatpush1.msra.mxu0 0.0
      %1041 = vmatprep.subr.mxu0 0.0
      %1042 = vmatpush1.msra.mxu0 0.0
      %1043 = vmatprep.mubr.f32.mxu0 0.0
      %1044 = vmatmul.mubr.f32.gmra.mrb[0].mxu0 %v940
      %v1045 = vpop.f32.mrb[0].mxu0
      %v1046 = vadd.f32 %v977, %v1045
      %v1047 = vpop.f32.mrb[0].mxu0
      %1048 = vmatprep.mubr.f32.mxu0 0.0
      %1049 = vmatmul.mubr.f32.gmra.mrb[0].mxu0 %v941
      %v1050 = vpop.f32.mrb[0].mxu0
      %v1051 = vadd.f32 %v977, %v1050
      %v1052 = vpop.f32.mrb[0].mxu0
      %1053 = vmatprep.mubr.f32.mxu0 0.0
      %1054 = vmatmul.mubr.f32.gmra.mrb[0].mxu0 %v942
      %v1055 = vpop.f32.mrb[0].mxu0
      %v1056 = vadd.f32 %v977, %v1055
      %v1057 = vpop.f32.mrb[0].mxu0
      %1058 = vmatprep.mubr.f32.mxu0 0.0
      %1059 = vmatmul.mubr.f32.gmra.mrb[0].mxu0 %v943
      %v1060 = vpop.f32.mrb[0].mxu0
      %v1061 = vadd.f32 %v977, %v1060
      %v1062 = vpop.f32.mrb[0].mxu0
      %1063 = vmatprep.mubr.f32.mxu0 0.0
      %1064 = vmatmul.mubr.f32.gmra.mrb[0].mxu0 %v944
      %v1065 = vpop.f32.mrb[0].mxu0
      %v1066 = vadd.f32 %v977, %v1065
      %v1067 = vpop.f32.mrb[0].mxu0
      %1068 = vmatprep.mubr.f32.mxu0 0.0
      %1069 = vmatmul.mubr.f32.gmra.mrb[0].mxu0 %v945
      %v1070 = vpop.f32.mrb[0].mxu0
      %v1071 = vadd.f32 %v977, %v1070
      %v1072 = vpop.f32.mrb[0].mxu0
      %1073 = vmatprep.mubr.f32.mxu0 0.0
      %1074 = vmatmul.mubr.f32.gmra.mrb[0].mxu0 %v946
      %v1075 = vpop.f32.mrb[0].mxu0
      %v1076 = vadd.f32 %v977, %v1075
      %v1077 = vpop.f32.mrb[0].mxu0
      %1078 = vmatprep.mubr.f32.mxu0 0.0
      %1079 = vmatmul.mubr.f32.gmra.mrb[0].mxu0 %v947
      %v1080 = vpop.f32.mrb[0].mxu0
      %v1081 = vadd.f32 %v977, %v1080
      %v1082 = vpop.f32.mrb[0].mxu0
      %1083 = vmatprep.mubr.f32.mxu0 0.0
      %1084 = vmatmul.mubr.f32.gmra.mrb[0].mxu0 %v948
      %v1085 = vpop.f32.mrb[0].mxu0
      %v1086 = vadd.f32 %v977, %v1085
      %v1087 = vpop.f32.mrb[0].mxu0
      %1088 = vmatprep.mubr.f32.mxu0 0.0
      %1089 = vmatmul.mubr.f32.gmra.mrb[0].mxu0 %v949
      %v1090 = vpop.f32.mrb[0].mxu0
      %v1091 = vadd.f32 %v977, %v1090
      %v1092 = vpop.f32.mrb[0].mxu0
      %1093 = vmatprep.mubr.f32.mxu0 0.0
      %1094 = vmatmul.mubr.f32.gmra.mrb[0].mxu0 %v950
      %v1095 = vpop.f32.mrb[0].mxu0
      %v1096 = vadd.f32 %v977, %v1095
      %v1097 = vpop.f32.mrb[0].mxu0
      %1098 = vmatprep.mubr.f32.mxu0 0.0
      %1099 = vmatmul.mubr.f32.gmra.mrb[0].mxu0 %v951
      %v1100 = vpop.f32.mrb[0].mxu0
      %v1101 = vadd.f32 %v977, %v1100
      %v1102 = vpop.f32.mrb[0].mxu0
      %1103 = vmatprep.mubr.f32.mxu0 0.0
      %1104 = vmatmul.mubr.f32.gmra.mrb[0].mxu0 %v952
      %v1105 = vpop.f32.mrb[0].mxu0
      %v1106 = vadd.f32 %v977, %v1105
      %v1107 = vpop.f32.mrb[0].mxu0
      %1108 = vmatprep.mubr.f32.mxu0 0.0
      %1109 = vmatmul.mubr.f32.gmra.mrb[0].mxu0 %v953
      %v1110 = vpop.f32.mrb[0].mxu0
      %v1111 = vadd.f32 %v977, %v1110
      %v1112 = vpop.f32.mrb[0].mxu0
      %1113 = vmatprep.mubr.f32.mxu0 0.0
      %1114 = vmatmul.mubr.f32.gmra.mrb[0].mxu0 %v954
      %v1115 = vpop.f32.mrb[0].mxu0
      %v1116 = vadd.f32 %v977, %v1115
      %v1117 = vpop.f32.mrb[0].mxu0
      %1118 = vmatprep.mubr.f32.mxu0 0.0
      %1119 = vmatmul.mubr.f32.gmra.mrb[0].mxu0 %v955
      %v1120 = vpop.f32.mrb[0].mxu0
      %v1121 = vadd.f32 %v977, %v1120
      %v1122 = vpop.f32.mrb[0].mxu0
      %1123 = vdwg.mxu0
      %vm1124 = vcmask 31744
      %1125 = vst.msk [vmem:[%s308] sm:$0xff] %vm1124, %v1046
      %1126 = vst.msk [vmem:[%s308 + $0x8] sm:$0xff] %vm1124, %v1051
      %1127 = vst.msk [vmem:[%s308 + $0x10] sm:$0xff] %vm1124, %v1056
      %1128 = vst.msk [vmem:[%s308 + $0x18] sm:$0xff] %vm1124, %v1061
      %1129 = vst.msk [vmem:[%s308 + $0x20] sm:$0xff] %vm1124, %v1066
      %1130 = vst.msk [vmem:[%s308 + $0x28] sm:$0xff] %vm1124, %v1071
      %1131 = vst.msk [vmem:[%s308 + $0x30] sm:$0xff] %vm1124, %v1076
      %1132 = vst.msk [vmem:[%s308 + $0x38] sm:$0xff] %vm1124, %v1081
      %1133 = vst.msk [vmem:[%s308 + $0x40] sm:$0xff] %vm1124, %v1086
      %1134 = vst.msk [vmem:[%s308 + $0x48] sm:$0xff] %vm1124, %v1091
      %1135 = vst.msk [vmem:[%s308 + $0x50] sm:$0xff] %vm1124, %v1096
      %1136 = vst.msk [vmem:[%s308 + $0x58] sm:$0xff] %vm1124, %v1101
      %1137 = vst.msk [vmem:[%s308 + $0x60] sm:$0xff] %vm1124, %v1106
      %1138 = vst.msk [vmem:[%s308 + $0x68] sm:$0xff] %vm1124, %v1111
      %1139 = vst.msk [vmem:[%s308 + $0x70] sm:$0xff] %vm1124, %v1116
      %1140 = vst.msk [vmem:[%s308 + $0x78] sm:$0xff] %vm1124, %v1121
      %s1141 = smul.u32 16, %s20
      %p1142 = scmp.lt.s32.totalorder %s1141, 63
      %s1143 = scalar_select %p1142, %s1141, 63
      %s1144 = smul.addr %s1143, 8
      %s1145 = scalar_lea.vmem %s8, %s1144
      // Predicated region
      $region53: #{ode_func_wrapper.1} parent=51 // pred_check
        %p1146 = pneg %p211
      $region54: #{ode_func_wrapper.1} parent=51 // pred_check_branch
        %1148 = sbr.rel (%p1146) target = $region56
      $region55: #{ode_func_wrapper.1} parent=51 // pred_region
        %s1149 = smul.u32 16, %s20
      $region56: #{ode_func_wrapper.1} parent=51 // pred_fallthru
        _
    $region52: #{ode_func_wrapper.1} parent=5 // pred_fallthru
      _
    %p1150 = scmp.le.s32.totalorder 2, %s15
    // Predicated region
    $region57: #{ode_func_wrapper.1} parent=5 // pred_check
      %p1151 = pneg %p1150
    $region58: #{ode_func_wrapper.1} parent=5 // pred_check_branch
      %1153 = sbr.rel (%p1151) target = $region60
    $region59: #{ode_func_wrapper.1} parent=5 // pred_region
      %s1154 = ssub.s32 %s15, 2
      // Predicated region
      $region61: #{ode_func_wrapper.1} parent=59 // pred_check
        %p1155 = pneg %p217
      $region62: #{ode_func_wrapper.1} parent=59 // pred_check_branch
        %1157 = sbr.rel (%p1155) target = $region64
      $region63: #{ode_func_wrapper.1} parent=59 // pred_region
        %s1158 = smul.u32 16, %s21
        %p1159 = scmp.lt.s32.totalorder %s1158, 63
        %s1160 = scalar_select %p1159, %s1158, 63
        %s1161 = smul.addr %s1160, 8
        %s1162 = scalar_lea.vmem %s8, %s1161
      $region64: #{ode_func_wrapper.1} parent=59 // pred_fallthru
        _
    $region60: #{ode_func_wrapper.1} parent=5 // pred_fallthru
      _
  $region6: #{ode_func_wrapper.1} parent=0 // loop_footer
    %s19 = sadd.s32 1, %s15
  $region7: #{ode_func_wrapper.1} parent=0 // loop_footer_branch
    %14 = sbr.rel target = $region3
  $region8: #{ode_func_wrapper.1} parent=0 // loop_exit
    _

</llo_original>
